<compile_context>
chip_gen: v7x
topology: tpu7x:2x2x1
jax: 0.10.0
libtpu: 0.0.40
codegen_flags: <defaults>
</compile_context>

<pallas_src>
import functools
import math

import jax
import jax.numpy as jnp
from jax.experimental import pallas as pl
from jax.experimental.pallas import tpu as pltpu

_DEFAULT_ROW_CAP = 4096     # max rows per grid step (per-step overhead amortized long before)


# -----------------------------------------------------------------------------------
# Kernels
# -----------------------------------------------------------------------------------
def _packed_argmax_embed_kernel(x_ref, e_ref, o_ref, *, seg):
    """Packed lane-dense path.

    x_ref: (tile_p, 128) — G = 128//seg logical rows per physical row, seg lanes each.
    e_ref: (128, G*D)    — block-diagonal embedding table (resident, constant index_map).
    o_ref: (tile_p, G*D) — packed lane-dense output tile.
    """
    x = x_ref[...]                                   # (tp, W) f32, W == 128
    tp, W = x.shape
    f32 = x.dtype

    lane = jax.lax.broadcasted_iota(jnp.int32, (1, W), 1)
    pos = lane & (seg - 1)                           # position within the seg-wide group

    # --- segmented max over each seg-wide lane group: XOR butterfly on the XLU ---
    # pltpu.roll lane rotations; wrapped lanes are never selected within a segment,
    # so no -inf padding / concatenate materialization is required.
    m = x
    k = 1
    while k < seg:
        up = pltpu.roll(m, shift=W - k, axis=1)      # up[l] = m[(l + k) % W]
        dn = pltpu.roll(m, shift=k, axis=1)          # dn[l] = m[(l - k) % W]
        m = jnp.maximum(m, jnp.where((pos & k) == 0, up, dn))
        k *= 2
    is_max = x == m                                  # may be True at several lanes on ties

    # --- first-occurrence tie-break (matches torch.argmax): inclusive prefix count ---
    c = is_max.astype(f32)
    k = 1
    while k < seg:
        prev = pltpu.roll(c, shift=k, axis=1)        # prev[l] = c[(l - k) % W]
        c = c + jnp.where(pos >= k, prev, 0.0)       # masked: never crosses segment start
        k *= 2
    onehot = (is_max & (c == 1.0)).astype(e_ref.dtype)

    # --- gather = one-hot @ block-diagonal table (MXU); emits lane-dense tile ---
    o_ref[...] = jnp.dot(
        onehot, e_ref[...], preferred_element_type=jnp.float32
    ).astype(o_ref.dtype)


def _generic_argmax_embed_kernel(x_ref, emb_ref, o_ref):
    """Fallback (C > 128 or table too large for the packed block-diagonal layout)."""
    x = x_ref[...]                                    # (tile_n, C)
    n_cls = x.shape[1]
    col = jax.lax.broadcasted_iota(jnp.int32, x.shape, 1)
    row_max = jnp.max(x, axis=1, keepdims=True)
    idx = jnp.min(jnp.where(x == row_max, col, n_cls), axis=1, keepdims=True)
    onehot = (col == idx).astype(emb_ref.dtype)
    o_ref[...] = jnp.dot(
        onehot, emb_ref[...], preferred_element_type=jnp.float32
    ).astype(o_ref.dtype)


# -----------------------------------------------------------------------------------
# VMEM budgeting / tiling helpers
# -----------------------------------------------------------------------------------
def _round_up(v, m):
    return ((v + m - 1) // m) * m


def _tpu_vmem_bytes():
    try:
        return int(pltpu.get_tpu_info().vmem_capacity_bytes)
    except Exception:
        return 64 << 20                               # conservative (v7x per-TensorCore VMEM)


def _plan_row_tile(n_rows, bytes_per_row, resident_bytes, budget_bytes, row_cap):
    """Largest 8-aligned row tile whose pipelined footprint fits the byte budget."""
    avail = budget_bytes - resident_bytes
    if avail < 8 * bytes_per_row:
        return None
    tile = min(avail // bytes_per_row, row_cap, _round_up(n_rows, 8))
    tile = (tile // 8) * 8
    if tile < 8:
        return None
    # Keep >= 8 grid steps (2 TensorCores x pipeline depth on v7x) only when tiles can
    # stay >= 512 rows; the cap never binds for small n_rows, so single-core v5e/v6e
    # keep their full-size tiles.
    if n_rows >= 8 * 512:
        tile = min(tile, _round_up(pl.cdiv(n_rows, 8), 8))
    return tile


def _vmem_limit_bytes(footprint, phys):
    return int(min(phys - (2 << 20), max(32 << 20, footprint + (8 << 20))))


def _compiler_params(footprint, phys):
    return pltpu.CompilerParams(
        dimension_semantics=("parallel",),
        vmem_limit_bytes=_vmem_limit_bytes(footprint, phys),
    )


# -----------------------------------------------------------------------------------
# Forward wrappers
# -----------------------------------------------------------------------------------
def _forward_generic(x, w, *, budget, phys, row_cap):
    N, C = x.shape
    _, D = w.shape
    table_bytes = 2 * _round_up(C, 8) * _round_up(D, 128) * 4        # table, 2 buffers
    row_bytes = 2 * 4 * (_round_up(C, 128) + _round_up(D, 128))      # dbl-buffered in+out rows
    tile_n = _plan_row_tile(N, row_bytes, table_bytes, budget, row_cap)
    if N < 8:
        tile_n = N                                    # single full-extent block (legal)
    elif tile_n is None:
        tile_n = 8                                    # table dominates VMEM; smallest legal tile
    grid = (pl.cdiv(N, tile_n),)
    footprint = table_bytes + tile_n * row_bytes
    return pl.pallas_call(
        _generic_argmax_embed_kernel,
        out_shape=jax.ShapeDtypeStruct((N, D), w.dtype),
        grid_spec=pltpu.PrefetchScalarGridSpec(
            num_scalar_prefetch=0,
            grid=grid,
            in_specs=[
                pl.BlockSpec((tile_n, C), lambda i: (i, 0)),
                pl.BlockSpec((C, D), lambda i: (0, 0)),   # full table, resident
            ],
            out_specs=pl.BlockSpec((tile_n, D), lambda i: (i, 0)),
        ),
        compiler_params=_compiler_params(footprint, phys),
    )(x, w)


def make_initialization_forward(emb_weight, *, row_cap=_DEFAULT_ROW_CAP):
    """Build forward(x) = emb_weight[argmax(x, axis=1)] with the packed block-diagonal
    embedding table precomputed ONCE (reuse this closure when the weight is reused).

    NOTE: rows containing NaN yield an all-zero output row (torch.argmax would pick the
    NaN position); well-formed inputs are unaffected.
    """
    C, D = emb_weight.shape
    phys = _tpu_vmem_bytes()
    budget = min(phys // 2, 96 << 20)                 # pipelined working-set target

    cp = 1 if C <= 1 else 1 << (C - 1).bit_length()   # classes padded to a power of two
    use_packed = cp <= 128
    if use_packed:
        G = 128 // cp                                 # logical rows per 128-lane row
        WD = G * D                                    # packed (lane-dense) output width
        wd_pad = _round_up(WD, 128)
        table_bytes = 2 * 128 * wd_pad * 4            # conservatively assume 2 table buffers
        row_bytes = 2 * 128 * 4 + 2 * wd_pad * 4      # dbl-buffered input + output rows
        use_packed = table_bytes + 8 * row_bytes <= budget

    if use_packed:
        w_p = emb_weight if cp == C else jnp.pad(emb_weight, ((0, cp - C), (0, 0)))
        e_bd = jnp.kron(jnp.eye(G, dtype=emb_weight.dtype), w_p)     # (128, G*D), built once
    else:
        e_bd = None
        # TODO(synk): for very large C*D tables add a true row-gather path
        # (pl.Element index_map / manual DMA) instead of the one-hot matmul fallback.

    def forward(x):
        N, Cx = x.shape
        assert Cx == C, "x channel dim must match embedding vocab size"
        if not use_packed:
            return _forward_generic(x, emb_weight, budget=budget, phys=phys, row_cap=row_cap)

        # --- packed lane-dense path ---
        n_pad = _round_up(N, 8 * G)                   # P = n_pad // G is a multiple of 8
        if cp == C and n_pad == N:
            xp = x                                    # pure row-major reshape, no copy needed
        else:
            xp = jnp.pad(x, ((0, n_pad - N), (0, cp - C)), constant_values=-jnp.inf)
        P = n_pad // G
        x_packed = xp.reshape(P, 128)

        tile_p = _plan_row_tile(P, row_bytes, table_bytes, budget, row_cap)
        assert tile_p is not None                     # guaranteed by the use_packed gate
        grid = (pl.cdiv(P, tile_p),)
        footprint = table_bytes + tile_p * row_bytes

        kernel = functools.partial(_packed_argmax_embed_kernel, seg=cp)
        out_p = pl.pallas_call(
            kernel,
            out_shape=jax.ShapeDtypeStruct((P, WD), emb_weight.dtype),
            grid_spec=pltpu.PrefetchScalarGridSpec(
                num_scalar_prefetch=0,
                grid=grid,
                in_specs=[
                    pl.BlockSpec((tile_p, 128), lambda i: (i, 0)),
                    # constant index_map -> fetched once, kept resident across grid steps
                    pl.BlockSpec((128, WD), lambda i: (0, 0)),
                ],
                out_specs=pl.BlockSpec((tile_p, WD), lambda i: (i, 0)),
            ),
            compiler_params=_compiler_params(footprint, phys),
        )(x_packed, e_bd)
        return out_p.reshape(n_pad, D)[:N]            # pure view back to (N, D), drop row pad

    return jax.jit(forward)


def initialization_forward(x, emb_weight, *, row_cap=_DEFAULT_ROW_CAP):
    """One-shot convenience wrapper (rebuilds the packed table every call;
    prefer make_initialization_forward when the weight is reused)."""
    return make_initialization_forward(emb_weight, row_cap=row_cap)(x)


def xavier_normal(key, fan_in, fan_out, dtype=jnp.float32):
    # nn.init.xavier_normal_ on an (fan_in, fan_out) weight: std = sqrt(2/(fan_in+fan_out))
    std = math.sqrt(2.0 / (fan_in + fan_out))
    return std * jax.random.normal(key, (fan_in, fan_out), dtype=dtype)


if __name__ == "__main__":
    key = jax.random.PRNGKey(0)
    k_w1, k_x1, k_w2, k_x2, k_w3, k_x3 = jax.random.split(key, 6)

    # 1) Packed lane-dense path, power-of-two C; row_cap forces a multi-step grid.
    in_channels, out_channels, num_nodes = 16, 32, 4096
    w1 = xavier_normal(k_w1, in_channels, out_channels)
    x1 = jax.random.normal(k_x1, (num_nodes, in_channels), dtype=jnp.float32)
    fwd1 = make_initialization_forward(w1, row_cap=128)
    out1 = jax.block_until_ready(fwd1(x1))
    ref1 = w1[jnp.argmax(x1, axis=1)]
    assert out1.shape == (num_nodes, out_channels)
    assert jnp.allclose(out1, ref1, atol=1e-6), "packed path mismatch vs reference"

    # 2) Packed path via -inf column padding (non-power-of-two C) + ragged row padding.
    w2 = xavier_normal(k_w2, 12, 24)
    x2 = jax.random.normal(k_x2, (515, 12), dtype=jnp.float32)
    out2 = jax.block_until_ready(make_initialization_forward(w2)(x2))
    ref2 = w2[jnp.argmax(x2, axis=1)]
    assert jnp.allclose(out2, ref2, atol=1e-6), "padded packed path mismatch vs reference"

    # 3) Generic fallback (C > 128 classes).
    w3 = xavier_normal(k_w3, 200, 48)
    x3 = jax.random.normal(k_x3, (256, 200), dtype=jnp.float32)
    out3 = jax.block_until_ready(make_initialization_forward(w3)(x3))
    ref3 = w3[jnp.argmax(x3, axis=1)]
    assert jnp.allclose(out3, ref3, atol=1e-6), "generic path mismatch vs reference"

    print("KERNEL_OK")
</pallas_src>

<mosaic_0001>
module attributes {stable_mosaic.version = 11 : i64} {
  func.func @_packed_argmax_embed_kernel(%arg0: i32, %arg1: memref<128x128xf32, #tpu.memory_space<vmem>>, %arg2: memref<128x256xf32, #tpu.memory_space<vmem>>, %arg3: memref<128x256xf32, #tpu.memory_space<vmem>>) attributes {dimension_semantics = [#tpu.dimension_semantics<parallel>], iteration_bounds = array<i64: 4>, scalar_prefetch = 0 : i64, scratch_operands = 0 : i64, tpu.core_type = #tpu.core_type<tc>, window_params = [{transform_indices = @transform_0, window_bounds = array<i64: 128, 128>}, {pipeline_mode = #tpu.pipeline_mode<synchronous>, transform_indices = @transform_1, window_bounds = array<i64: 128, 256>}, {transform_indices = @transform_2, window_bounds = array<i64: 128, 256>}]} {
    %c0 = arith.constant 0 : index
    %c0_0 = arith.constant 0 : index
    %0 = vector.load %arg1[%c0, %c0_0] : memref<128x128xf32, #tpu.memory_space<vmem>>, vector<128x128xf32>
    %1 = tpu.iota {dimensions = array<i32: 1>} : vector<1x128xi32>
    %c15_i32 = arith.constant 15 : i32
    %2 = vector.broadcast %c15_i32 : i32 to vector<1x128xi32>
    %3 = arith.andi %1, %2 : vector<1x128xi32>
    %c127_i32 = arith.constant 127 : i32
    %4 = tpu.dynamic_rotate %0 by %c127_i32 dim 1 : vector<128x128xf32>, i32 -> vector<128x128xf32>
    %c1_i32 = arith.constant 1 : i32
    %5 = tpu.dynamic_rotate %0 by %c1_i32 dim 1 : vector<128x128xf32>, i32 -> vector<128x128xf32>
    %c1_i32_1 = arith.constant 1 : i32
    %6 = vector.broadcast %c1_i32_1 : i32 to vector<1x128xi32>
    %7 = arith.andi %3, %6 : vector<1x128xi32>
    %c0_i32 = arith.constant 0 : i32
    %8 = vector.broadcast %c0_i32 : i32 to vector<1x128xi32>
    %9 = arith.cmpi eq, %7, %8 : vector<1x128xi32>
    %10 = vector.shape_cast %9 : vector<1x128xi1> to vector<1x128xi1>
    %11 = vector.broadcast %10 : vector<1x128xi1> to vector<128x128xi1>
    %12 = arith.select %11, %4, %5 : vector<128x128xi1>, vector<128x128xf32>
    %13 = arith.maximumf %0, %12 : vector<128x128xf32>
    %c126_i32 = arith.constant 126 : i32
    %14 = tpu.dynamic_rotate %13 by %c126_i32 dim 1 : vector<128x128xf32>, i32 -> vector<128x128xf32>
    %c2_i32 = arith.constant 2 : i32
    %15 = tpu.dynamic_rotate %13 by %c2_i32 dim 1 : vector<128x128xf32>, i32 -> vector<128x128xf32>
    %c2_i32_2 = arith.constant 2 : i32
    %16 = vector.broadcast %c2_i32_2 : i32 to vector<1x128xi32>
    %17 = arith.andi %3, %16 : vector<1x128xi32>
    %c0_i32_3 = arith.constant 0 : i32
    %18 = vector.broadcast %c0_i32_3 : i32 to vector<1x128xi32>
    %19 = arith.cmpi eq, %17, %18 : vector<1x128xi32>
    %20 = vector.shape_cast %19 : vector<1x128xi1> to vector<1x128xi1>
    %21 = vector.broadcast %20 : vector<1x128xi1> to vector<128x128xi1>
    %22 = arith.select %21, %14, %15 : vector<128x128xi1>, vector<128x128xf32>
    %23 = arith.maximumf %13, %22 : vector<128x128xf32>
    %c124_i32 = arith.constant 124 : i32
    %24 = tpu.dynamic_rotate %23 by %c124_i32 dim 1 : vector<128x128xf32>, i32 -> vector<128x128xf32>
    %c4_i32 = arith.constant 4 : i32
    %25 = tpu.dynamic_rotate %23 by %c4_i32 dim 1 : vector<128x128xf32>, i32 -> vector<128x128xf32>
    %c4_i32_4 = arith.constant 4 : i32
    %26 = vector.broadcast %c4_i32_4 : i32 to vector<1x128xi32>
    %27 = arith.andi %3, %26 : vector<1x128xi32>
    %c0_i32_5 = arith.constant 0 : i32
    %28 = vector.broadcast %c0_i32_5 : i32 to vector<1x128xi32>
    %29 = arith.cmpi eq, %27, %28 : vector<1x128xi32>
    %30 = vector.shape_cast %29 : vector<1x128xi1> to vector<1x128xi1>
    %31 = vector.broadcast %30 : vector<1x128xi1> to vector<128x128xi1>
    %32 = arith.select %31, %24, %25 : vector<128x128xi1>, vector<128x128xf32>
    %33 = arith.maximumf %23, %32 : vector<128x128xf32>
    %c120_i32 = arith.constant 120 : i32
    %34 = tpu.dynamic_rotate %33 by %c120_i32 dim 1 : vector<128x128xf32>, i32 -> vector<128x128xf32>
    %c8_i32 = arith.constant 8 : i32
    %35 = tpu.dynamic_rotate %33 by %c8_i32 dim 1 : vector<128x128xf32>, i32 -> vector<128x128xf32>
    %c8_i32_6 = arith.constant 8 : i32
    %36 = vector.broadcast %c8_i32_6 : i32 to vector<1x128xi32>
    %37 = arith.andi %3, %36 : vector<1x128xi32>
    %c0_i32_7 = arith.constant 0 : i32
    %38 = vector.broadcast %c0_i32_7 : i32 to vector<1x128xi32>
    %39 = arith.cmpi eq, %37, %38 : vector<1x128xi32>
    %40 = vector.shape_cast %39 : vector<1x128xi1> to vector<1x128xi1>
    %41 = vector.broadcast %40 : vector<1x128xi1> to vector<128x128xi1>
    %42 = arith.select %41, %34, %35 : vector<128x128xi1>, vector<128x128xf32>
    %43 = arith.maximumf %33, %42 : vector<128x128xf32>
    %44 = arith.cmpf oeq, %0, %43 : vector<128x128xf32>
    %45 = arith.extui %44 : vector<128x128xi1> to vector<128x128xi32>
    %46 = arith.sitofp %45 : vector<128x128xi32> to vector<128x128xf32>
    %c1_i32_8 = arith.constant 1 : i32
    %47 = tpu.dynamic_rotate %46 by %c1_i32_8 dim 1 : vector<128x128xf32>, i32 -> vector<128x128xf32>
    %c1_i32_9 = arith.constant 1 : i32
    %48 = vector.broadcast %c1_i32_9 : i32 to vector<1x128xi32>
    %49 = arith.cmpi sge, %3, %48 : vector<1x128xi32>
    %cst = arith.constant 0.000000e+00 : f32
    %50 = vector.shape_cast %49 : vector<1x128xi1> to vector<1x128xi1>
    %51 = vector.broadcast %50 : vector<1x128xi1> to vector<128x128xi1>
    %52 = vector.broadcast %cst : f32 to vector<128x128xf32>
    %53 = arith.select %51, %47, %52 : vector<128x128xi1>, vector<128x128xf32>
    %54 = arith.addf %46, %53 : vector<128x128xf32>
    %c2_i32_10 = arith.constant 2 : i32
    %55 = tpu.dynamic_rotate %54 by %c2_i32_10 dim 1 : vector<128x128xf32>, i32 -> vector<128x128xf32>
    %c2_i32_11 = arith.constant 2 : i32
    %56 = vector.broadcast %c2_i32_11 : i32 to vector<1x128xi32>
    %57 = arith.cmpi sge, %3, %56 : vector<1x128xi32>
    %cst_12 = arith.constant 0.000000e+00 : f32
    %58 = vector.shape_cast %57 : vector<1x128xi1> to vector<1x128xi1>
    %59 = vector.broadcast %58 : vector<1x128xi1> to vector<128x128xi1>
    %60 = vector.broadcast %cst_12 : f32 to vector<128x128xf32>
    %61 = arith.select %59, %55, %60 : vector<128x128xi1>, vector<128x128xf32>
    %62 = arith.addf %54, %61 : vector<128x128xf32>
    %c4_i32_13 = arith.constant 4 : i32
    %63 = tpu.dynamic_rotate %62 by %c4_i32_13 dim 1 : vector<128x128xf32>, i32 -> vector<128x128xf32>
    %c4_i32_14 = arith.constant 4 : i32
    %64 = vector.broadcast %c4_i32_14 : i32 to vector<1x128xi32>
    %65 = arith.cmpi sge, %3, %64 : vector<1x128xi32>
    %cst_15 = arith.constant 0.000000e+00 : f32
    %66 = vector.shape_cast %65 : vector<1x128xi1> to vector<1x128xi1>
    %67 = vector.broadcast %66 : vector<1x128xi1> to vector<128x128xi1>
    %68 = vector.broadcast %cst_15 : f32 to vector<128x128xf32>
    %69 = arith.select %67, %63, %68 : vector<128x128xi1>, vector<128x128xf32>
    %70 = arith.addf %62, %69 : vector<128x128xf32>
    %c8_i32_16 = arith.constant 8 : i32
    %71 = tpu.dynamic_rotate %70 by %c8_i32_16 dim 1 : vector<128x128xf32>, i32 -> vector<128x128xf32>
    %c8_i32_17 = arith.constant 8 : i32
    %72 = vector.broadcast %c8_i32_17 : i32 to vector<1x128xi32>
    %73 = arith.cmpi sge, %3, %72 : vector<1x128xi32>
    %cst_18 = arith.constant 0.000000e+00 : f32
    %74 = vector.shape_cast %73 : vector<1x128xi1> to vector<1x128xi1>
    %75 = vector.broadcast %74 : vector<1x128xi1> to vector<128x128xi1>
    %76 = vector.broadcast %cst_18 : f32 to vector<128x128xf32>
    %77 = arith.select %75, %71, %76 : vector<128x128xi1>, vector<128x128xf32>
    %78 = arith.addf %70, %77 : vector<128x128xf32>
    %cst_19 = arith.constant 1.000000e+00 : f32
    %79 = vector.broadcast %cst_19 : f32 to vector<128x128xf32>
    %80 = arith.cmpf oeq, %78, %79 : vector<128x128xf32>
    %81 = arith.andi %44, %80 : vector<128x128xi1>
    %82 = arith.extui %81 : vector<128x128xi1> to vector<128x128xi32>
    %83 = arith.sitofp %82 : vector<128x128xi32> to vector<128x128xf32>
    %c0_20 = arith.constant 0 : index
    %c0_21 = arith.constant 0 : index
    %84 = vector.load %arg2[%c0_20, %c0_21] : memref<128x256xf32, #tpu.memory_space<vmem>>, vector<128x256xf32>
    %cst_22 = arith.constant dense<0.000000e+00> : vector<128x256xf32>
    %85 = tpu.matmul %83, %84, %cst_22 {dimension_numbers = #tpu.dot_dimension_numbers<[1], [0], [0], [1], [0, 0, 1, 1], [], []>} : vector<128x128xf32>, vector<128x256xf32>, vector<128x256xf32> -> vector<128x256xf32>
    %c0_23 = arith.constant 0 : index
    %c0_24 = arith.constant 0 : index
    %86 = vector.load %arg3[%c0_23, %c0_24] : memref<128x256xf32, #tpu.memory_space<vmem>>, vector<128x256xf32>
    tpu.vector_store %arg3[%c0_23, %c0_24], %85 {strides = array<i32>} : memref<128x256xf32, #tpu.memory_space<vmem>>, vector<128x256xf32>,
    return
  }
  func.func @transform_0(%arg0: i32) -> (i32, i32) {
    %c0_i32 = arith.constant 0 : i32
    %c0_i32_0 = arith.constant 0 : i32
    return %arg0, %c0_i32 : i32, i32
  }
  func.func @transform_1(%arg0: i32) -> (i32, i32) {
    %c0_i32 = arith.constant 0 : i32
    %c0_i32_0 = arith.constant 0 : i32
    %c0_i32_1 = arith.constant 0 : i32
    return %c0_i32, %c0_i32_0 : i32, i32
  }
  func.func @transform_2(%arg0: i32) -> (i32, i32) {
    %c0_i32 = arith.constant 0 : i32
    %c0_i32_0 = arith.constant 0 : i32
    return %arg0, %c0_i32 : i32, i32
  }
}

</mosaic_0001>

<llo_original>
// kernel: forward.1
$region0: #{forward.1}
  #allocation0 [shape = 'u32[]', space=smem, size = 0x4, offset = 0x4, fixed_abs, tag = 'smem constant byte address 0x4 - core index']
  #allocation1 [shape = 'u32[144,128]{1,0:T(1,128)}', space=vmem, size = 0x12000, scoped, tag = 'internal scratch']
  %s0 = inlined_call_operand.vmem [shape: f32[512,128], index: 0, kind: input, shape index: {}]
  %s1 = inlined_call_operand.vmem [shape: f32[128,256], index: 1, kind: input, shape index: {}]
  %s2 = inlined_call_operand.vmem [shape: f32[512,256], index: 2, kind: output, shape index: {}]
  %s3 = sld [smem:[#allocation0]]
  $region41: #{forward.1} parent=0
    _
  %s5 = ssub.s32 1, %s3
  %s6 = scalar_select 0, %s5, %s3
  loop: start=0, step=1, limit=6
  $region2: #{forward.1} parent=0 // loop_pre_header
    _
  $region3: #{forward.1} parent=0 // loop_header
    %s8 = sphi 0, %s12
    %p9 = scmp.ge.s32.totalorder %s8, 6
    %s18 = sphi 0, %s20
    %s21 = sphi 0, %s18
    %s22 = sphi 0, %s21
    %s38 = sphi 0, %s22
    %s42 = sphi 0, %s42
    %s44 = sphi 0, %s42
    %s45 = sphi 0, %s44
    %s59 = sphi 0, %s45
    %s65 = sphi 0, %s67
    %s68 = sphi 0, %s65
    %s69 = sphi 0, %s68
    %s85 = sphi 0, %s69
  $region4: #{forward.1} parent=0 // loop_header_branch
    %11 = sbr.rel (%p9) target = $region8
  $region5: #{forward.1} parent=0 // loop_body
    %s13 = ssub.s32 %s8, 1
    %s14 = ssub.s32 %s8, 2
    %s15 = sadd.s32 %s8, 1
    %s16 = ssub.s32 %s8, %s15
    %p17 = scmp.eq.s32.totalorder %s16, 0
    %s19 = sadd.s32 %s18, 1
    %s20 = scalar_select %p17, %s18, %s19
    %p23 = pneg %p17
    %p24 = scmp.eq.s32.totalorder %s8, 3
    %p25 = por %p23, %p24
    %p26 = scmp.ne.s32.totalorder %s18, %s21
    %p27 = scmp.eq.s32.totalorder %s8, 0
    %p28 = por %p26, %p27
    %p29 = scmp.ne.s32.totalorder %s18, %s21
    %p30 = scmp.eq.s32.totalorder %s13, 3
    %p31 = por %p29, %p30
    %p32 = scmp.ne.s32.totalorder %s21, %s22
    %p33 = scmp.eq.s32.totalorder %s13, 0
    %p34 = por %p32, %p33
    %p35 = scmp.ne.s32.totalorder %s21, %s22
    %p36 = scmp.eq.s32.totalorder %s14, 3
    %p37 = por %p35, %p36
    %p39 = scmp.ne.s32.totalorder %s22, %s38
    %p40 = scmp.eq.s32.totalorder %s14, 0
    %p41 = por %p39, %p40
    %s43 = sadd.s32 %s42, 1
    %p46 = scmp.eq.s32.totalorder %s8, 3
    %p47 = scmp.ne.s32.totalorder %s42, %s44
    %p48 = scmp.eq.s32.totalorder %s8, 0
    %p49 = por %p47, %p48
    %p50 = scmp.ne.s32.totalorder %s42, %s44
    %p51 = scmp.eq.s32.totalorder %s13, 3
    %p52 = por %p50, %p51
    %p53 = scmp.ne.s32.totalorder %s44, %s45
    %p54 = scmp.eq.s32.totalorder %s13, 0
    %p55 = por %p53, %p54
    %p56 = scmp.ne.s32.totalorder %s44, %s45
    %p57 = scmp.eq.s32.totalorder %s14, 3
    %p58 = por %p56, %p57
    %p60 = scmp.ne.s32.totalorder %s45, %s59
    %p61 = scmp.eq.s32.totalorder %s14, 0
    %p62 = por %p60, %p61
    %s63 = ssub.s32 %s8, %s15
    %p64 = scmp.eq.s32.totalorder %s63, 0
    %s66 = sadd.s32 %s65, 1
    %s67 = scalar_select %p64, %s65, %s66
    %p70 = pneg %p64
    %p71 = scmp.eq.s32.totalorder %s8, 3
    %p72 = por %p70, %p71
    %p73 = scmp.ne.s32.totalorder %s65, %s68
    %p74 = scmp.eq.s32.totalorder %s8, 0
    %p75 = por %p73, %p74
    %p76 = scmp.ne.s32.totalorder %s65, %s68
    %p77 = scmp.eq.s32.totalorder %s13, 3
    %p78 = por %p76, %p77
    %p79 = scmp.ne.s32.totalorder %s68, %s69
    %p80 = scmp.eq.s32.totalorder %s13, 0
    %p81 = por %p79, %p80
    %p82 = scmp.ne.s32.totalorder %s68, %s69
    %p83 = scmp.eq.s32.totalorder %s14, 3
    %p84 = por %p82, %p83
    %p86 = scmp.ne.s32.totalorder %s69, %s85
    %p87 = scmp.eq.s32.totalorder %s14, 0
    %p88 = por %p86, %p87
    %p89 = scmp.le.s32.totalorder 1, %s8
    %p90 = scmp.lt.s32.totalorder %s8, 5
    %p91 = pnand %p89, %p90
    %p92 = pneg %p91
    // Predicated region
    $region9: #{forward.1} parent=5 // pred_check
      _
    $region10: #{forward.1} parent=5 // pred_check_branch
      %94 = sbr.rel (%p91) target = $region12
    $region11: #{forward.1} parent=5 // pred_region
      %s95 = ssub.s32 %s8, 1
      // Predicated region
      $region13: #{forward.1} parent=11 // pred_check
        %p96 = pneg %p55
      $region14: #{forward.1} parent=11 // pred_check_branch
        %98 = sbr.rel (%p96) target = $region16
      $region15: #{forward.1} parent=11 // pred_region
        _
      $region16: #{forward.1} parent=11 // pred_fallthru
        _
    $region12: #{forward.1} parent=5 // pred_fallthru
      _
    %p99 = scmp.lt.s32.totalorder %s8, 4
    // Predicated region
    $region17: #{forward.1} parent=5 // pred_check
      %p100 = pneg %p99
    $region18: #{forward.1} parent=5 // pred_check_branch
      %102 = sbr.rel (%p100) target = $region20
    $region19: #{forward.1} parent=5 // pred_region
      // Predicated region
      $region21: #{forward.1} parent=19 // pred_check
        %p103 = pneg %p28
      $region22: #{forward.1} parent=19 // pred_check_branch
        %105 = sbr.rel (%p103) target = $region24
      $region23: #{forward.1} parent=19 // pred_region
        %s106 = smul.u32 16, %s8
        %p107 = scmp.lt.s32.totalorder %s106, 63
        %s108 = scalar_select %p107, %s106, 63
        %s109 = smul.addr %s108, 8
        %s110 = scalar_lea.vmem %s0, %s109
        %s111 = smul.u32 16, %s8
      $region24: #{forward.1} parent=19 // pred_fallthru
        _
    $region20: #{forward.1} parent=5 // pred_fallthru
      _
    %p112 = scmp.le.s32.totalorder 1, %s8
    %p113 = scmp.lt.s32.totalorder %s8, 5
    %p114 = pnand %p112, %p113
    %p115 = pneg %p114
    // Predicated region
    $region25: #{forward.1} parent=5 // pred_check
      _
    $region26: #{forward.1} parent=5 // pred_check_branch
      %117 = sbr.rel (%p114) target = $region28
    $region27: #{forward.1} parent=5 // pred_region
      %s118 = ssub.s32 %s8, 1
      %s119 = smul.u32 16, %s13
      %p120 = scmp.lt.s32.totalorder %s119, 63
      %s121 = scalar_select %p120, %s119, 63
      %s122 = smul.addr %s121, 8
      %s123 = scalar_lea.vmem %s0, %s122
      %p124 = pneg %p34
      %p125 = pneg %p31
      %p126 = pneg %p55
      %p127 = pneg %p52
      %p128 = pneg %p81
      %p129 = pneg %p78
      %s130 = smul.u32 16, %s13
      %p131 = scmp.lt.s32.totalorder %s130, 63
      %s132 = scalar_select %p131, %s130, 63
      %s133 = smul.addr %s132, 2
      %s134 = smul.addr %s133, 8
      %s135 = scalar_lea.vmem %s2, %s134
      %s136 = smul.u32 16, %s13
      %p137 = scmp.lt.s32.totalorder %s136, 63
      %s138 = scalar_select %p137, %s136, 63
      %s139 = smul.addr %s138, 8
      %s140 = scalar_lea.vmem %s0, %s139
      %s141 = smul.u32 16, %s13
      %s142 = smul.u32 16, %s13
      %p143 = scmp.lt.s32.totalorder %s142, 63
      %s144 = scalar_select %p143, %s142, 63
      %s145 = smul.addr %s144, 2
      %s146 = smul.addr %s145, 8
      %s147 = scalar_lea.vmem %s2, %s146
      %s148 = smul.u32 16, %s13
      %v149 = vld [vmem:[%s140] sm:$0xff]
      %v150 = vld [vmem:[%s140 + $0x8] sm:$0xff]
      %v151 = vld [vmem:[%s140 + $0x10] sm:$0xff]
      %v152 = vld [vmem:[%s140 + $0x18] sm:$0xff]
      %v153 = vld [vmem:[%s140 + $0x20] sm:$0xff]
      %v154 = vld [vmem:[%s140 + $0x28] sm:$0xff]
      %v155 = vld [vmem:[%s140 + $0x30] sm:$0xff]
      %v156 = vld [vmem:[%s140 + $0x38] sm:$0xff]
      %v157 = vld [vmem:[%s140 + $0x40] sm:$0xff]
      %v158 = vld [vmem:[%s140 + $0x48] sm:$0xff]
      %v159 = vld [vmem:[%s140 + $0x50] sm:$0xff]
      %v160 = vld [vmem:[%s140 + $0x58] sm:$0xff]
      %v161 = vld [vmem:[%s140 + $0x60] sm:$0xff]
      %v162 = vld [vmem:[%s140 + $0x68] sm:$0xff]
      %v163 = vld [vmem:[%s140 + $0x70] sm:$0xff]
      %v164 = vld [vmem:[%s140 + $0x78] sm:$0xff]
      %v165 = vlaneseq
      %v166 = vand.u32 %v165, 127
      %v167 = vand.u32 %v166, 15
      %168 = vrot.lane.b32.xlu0 %v149, 127
      %v169 = vpop.permute.xlu0 %168
      %170 = vrot.lane.b32.xlu0 %v150, 127
      %v171 = vpop.permute.xlu0 %170
      %172 = vrot.lane.b32.xlu0 %v151, 127
      %v173 = vpop.permute.xlu0 %172
      %174 = vrot.lane.b32.xlu0 %v152, 127
      %v175 = vpop.permute.xlu0 %174
      %176 = vrot.lane.b32.xlu0 %v153, 127
      %v177 = vpop.permute.xlu0 %176
      %178 = vrot.lane.b32.xlu0 %v154, 127
      %v179 = vpop.permute.xlu0 %178
      %180 = vrot.lane.b32.xlu0 %v155, 127
      %v181 = vpop.permute.xlu0 %180
      %182 = vrot.lane.b32.xlu0 %v156, 127
      %v183 = vpop.permute.xlu0 %182
      %184 = vrot.lane.b32.xlu0 %v157, 127
      %v185 = vpop.permute.xlu0 %184
      %186 = vrot.lane.b32.xlu0 %v158, 127
      %v187 = vpop.permute.xlu0 %186
      %188 = vrot.lane.b32.xlu0 %v159, 127
      %v189 = vpop.permute.xlu0 %188
      %190 = vrot.lane.b32.xlu0 %v160, 127
      %v191 = vpop.permute.xlu0 %190
      %192 = vrot.lane.b32.xlu0 %v161, 127
      %v193 = vpop.permute.xlu0 %192
      %194 = vrot.lane.b32.xlu0 %v162, 127
      %v195 = vpop.permute.xlu0 %194
      %196 = vrot.lane.b32.xlu0 %v163, 127
      %v197 = vpop.permute.xlu0 %196
      %198 = vrot.lane.b32.xlu0 %v164, 127
      %v199 = vpop.permute.xlu0 %198
      %200 = vrot.lane.b32.xlu0 %v149, 1
      %v201 = vpop.permute.xlu0 %200
      %202 = vrot.lane.b32.xlu0 %v150, 1
      %v203 = vpop.permute.xlu0 %202
      %204 = vrot.lane.b32.xlu0 %v151, 1
      %v205 = vpop.permute.xlu0 %204
      %206 = vrot.lane.b32.xlu0 %v152, 1
      %v207 = vpop.permute.xlu0 %206
      %208 = vrot.lane.b32.xlu0 %v153, 1
      %v209 = vpop.permute.xlu0 %208
      %210 = vrot.lane.b32.xlu0 %v154, 1
      %v211 = vpop.permute.xlu0 %210
      %212 = vrot.lane.b32.xlu0 %v155, 1
      %v213 = vpop.permute.xlu0 %212
      %214 = vrot.lane.b32.xlu0 %v156, 1
      %v215 = vpop.permute.xlu0 %214
      %216 = vrot.lane.b32.xlu0 %v157, 1
      %v217 = vpop.permute.xlu0 %216
      %218 = vrot.lane.b32.xlu0 %v158, 1
      %v219 = vpop.permute.xlu0 %218
      %220 = vrot.lane.b32.xlu0 %v159, 1
      %v221 = vpop.permute.xlu0 %220
      %222 = vrot.lane.b32.xlu0 %v160, 1
      %v223 = vpop.permute.xlu0 %222
      %224 = vrot.lane.b32.xlu0 %v161, 1
      %v225 = vpop.permute.xlu0 %224
      %226 = vrot.lane.b32.xlu0 %v162, 1
      %v227 = vpop.permute.xlu0 %226
      %228 = vrot.lane.b32.xlu0 %v163, 1
      %v229 = vpop.permute.xlu0 %228
      %230 = vrot.lane.b32.xlu0 %v164, 1
      %v231 = vpop.permute.xlu0 %230
      %v232 = vand.u32 %v167, 1
      %vm233 = vcmp.eq.s32.totalorder %v232, 0
      %v234 = vsel %vm233, 1, 0
      %vm235 = vcmp.eq.s32.totalorder %v234, 1
      %v236 = vsel %vm235, %v169, %v201
      %v237 = vsel %vm235, %v171, %v203
      %v238 = vsel %vm235, %v173, %v205
      %v239 = vsel %vm235, %v175, %v207
      %v240 = vsel %vm235, %v177, %v209
      %v241 = vsel %vm235, %v179, %v211
      %v242 = vsel %vm235, %v181, %v213
      %v243 = vsel %vm235, %v183, %v215
      %v244 = vsel %vm235, %v185, %v217
      %v245 = vsel %vm235, %v187, %v219
      %v246 = vsel %vm235, %v189, %v221
      %v247 = vsel %vm235, %v191, %v223
      %v248 = vsel %vm235, %v193, %v225
      %v249 = vsel %vm235, %v195, %v227
      %v250 = vsel %vm235, %v197, %v229
      %v251 = vsel %vm235, %v199, %v231
      %v252 = vmax.f32 %v149, %v236
      %v253 = vmax.f32 %v150, %v237
      %v254 = vmax.f32 %v151, %v238
      %v255 = vmax.f32 %v152, %v239
      %v256 = vmax.f32 %v153, %v240
      %v257 = vmax.f32 %v154, %v241
      %v258 = vmax.f32 %v155, %v242
      %v259 = vmax.f32 %v156, %v243
      %v260 = vmax.f32 %v157, %v244
      %v261 = vmax.f32 %v158, %v245
      %v262 = vmax.f32 %v159, %v246
      %v263 = vmax.f32 %v160, %v247
      %v264 = vmax.f32 %v161, %v248
      %v265 = vmax.f32 %v162, %v249
      %v266 = vmax.f32 %v163, %v250
      %v267 = vmax.f32 %v164, %v251
      %268 = vrot.lane.b32.xlu0 %v252, 126
      %v269 = vpop.permute.xlu0 %268
      %270 = vrot.lane.b32.xlu0 %v253, 126
      %v271 = vpop.permute.xlu0 %270
      %272 = vrot.lane.b32.xlu0 %v254, 126
      %v273 = vpop.permute.xlu0 %272
      %274 = vrot.lane.b32.xlu0 %v255, 126
      %v275 = vpop.permute.xlu0 %274
      %276 = vrot.lane.b32.xlu0 %v256, 126
      %v277 = vpop.permute.xlu0 %276
      %278 = vrot.lane.b32.xlu0 %v257, 126
      %v279 = vpop.permute.xlu0 %278
      %280 = vrot.lane.b32.xlu0 %v258, 126
      %v281 = vpop.permute.xlu0 %280
      %282 = vrot.lane.b32.xlu0 %v259, 126
      %v283 = vpop.permute.xlu0 %282
      %284 = vrot.lane.b32.xlu0 %v260, 126
      %v285 = vpop.permute.xlu0 %284
      %286 = vrot.lane.b32.xlu0 %v261, 126
      %v287 = vpop.permute.xlu0 %286
      %288 = vrot.lane.b32.xlu0 %v262, 126
      %v289 = vpop.permute.xlu0 %288
      %290 = vrot.lane.b32.xlu0 %v263, 126
      %v291 = vpop.permute.xlu0 %290
      %292 = vrot.lane.b32.xlu0 %v264, 126
      %v293 = vpop.permute.xlu0 %292
      %294 = vrot.lane.b32.xlu0 %v265, 126
      %v295 = vpop.permute.xlu0 %294
      %296 = vrot.lane.b32.xlu0 %v266, 126
      %v297 = vpop.permute.xlu0 %296
      %298 = vrot.lane.b32.xlu0 %v267, 126
      %v299 = vpop.permute.xlu0 %298
      %300 = vrot.lane.b32.xlu0 %v252, 2
      %v301 = vpop.permute.xlu0 %300
      %302 = vrot.lane.b32.xlu0 %v253, 2
      %v303 = vpop.permute.xlu0 %302
      %304 = vrot.lane.b32.xlu0 %v254, 2
      %v305 = vpop.permute.xlu0 %304
      %306 = vrot.lane.b32.xlu0 %v255, 2
      %v307 = vpop.permute.xlu0 %306
      %308 = vrot.lane.b32.xlu0 %v256, 2
      %v309 = vpop.permute.xlu0 %308
      %310 = vrot.lane.b32.xlu0 %v257, 2
      %v311 = vpop.permute.xlu0 %310
      %312 = vrot.lane.b32.xlu0 %v258, 2
      %v313 = vpop.permute.xlu0 %312
      %314 = vrot.lane.b32.xlu0 %v259, 2
      %v315 = vpop.permute.xlu0 %314
      %316 = vrot.lane.b32.xlu0 %v260, 2
      %v317 = vpop.permute.xlu0 %316
      %318 = vrot.lane.b32.xlu0 %v261, 2
      %v319 = vpop.permute.xlu0 %318
      %320 = vrot.lane.b32.xlu0 %v262, 2
      %v321 = vpop.permute.xlu0 %320
      %322 = vrot.lane.b32.xlu0 %v263, 2
      %v323 = vpop.permute.xlu0 %322
      %324 = vrot.lane.b32.xlu0 %v264, 2
      %v325 = vpop.permute.xlu0 %324
      %326 = vrot.lane.b32.xlu0 %v265, 2
      %v327 = vpop.permute.xlu0 %326
      %328 = vrot.lane.b32.xlu0 %v266, 2
      %v329 = vpop.permute.xlu0 %328
      %330 = vrot.lane.b32.xlu0 %v267, 2
      %v331 = vpop.permute.xlu0 %330
      %v332 = vand.u32 %v167, 2
      %vm333 = vcmp.eq.s32.totalorder %v332, 0
      %v334 = vsel %vm333, 1, 0
      %vm335 = vcmp.eq.s32.totalorder %v334, 1
      %v336 = vsel %vm335, %v269, %v301
      %v337 = vsel %vm335, %v271, %v303
      %v338 = vsel %vm335, %v273, %v305
      %v339 = vsel %vm335, %v275, %v307
      %v340 = vsel %vm335, %v277, %v309
      %v341 = vsel %vm335, %v279, %v311
      %v342 = vsel %vm335, %v281, %v313
      %v343 = vsel %vm335, %v283, %v315
      %v344 = vsel %vm335, %v285, %v317
      %v345 = vsel %vm335, %v287, %v319
      %v346 = vsel %vm335, %v289, %v321
      %v347 = vsel %vm335, %v291, %v323
      %v348 = vsel %vm335, %v293, %v325
      %v349 = vsel %vm335, %v295, %v327
      %v350 = vsel %vm335, %v297, %v329
      %v351 = vsel %vm335, %v299, %v331
      %v352 = vmax.f32 %v252, %v336
      %v353 = vmax.f32 %v253, %v337
      %v354 = vmax.f32 %v254, %v338
      %v355 = vmax.f32 %v255, %v339
      %v356 = vmax.f32 %v256, %v340
      %v357 = vmax.f32 %v257, %v341
      %v358 = vmax.f32 %v258, %v342
      %v359 = vmax.f32 %v259, %v343
      %v360 = vmax.f32 %v260, %v344
      %v361 = vmax.f32 %v261, %v345
      %v362 = vmax.f32 %v262, %v346
      %v363 = vmax.f32 %v263, %v347
      %v364 = vmax.f32 %v264, %v348
      %v365 = vmax.f32 %v265, %v349
      %v366 = vmax.f32 %v266, %v350
      %v367 = vmax.f32 %v267, %v351
      %368 = vrot.lane.b32.xlu0 %v352, 124
      %v369 = vpop.permute.xlu0 %368
      %370 = vrot.lane.b32.xlu0 %v353, 124
      %v371 = vpop.permute.xlu0 %370
      %372 = vrot.lane.b32.xlu0 %v354, 124
      %v373 = vpop.permute.xlu0 %372
      %374 = vrot.lane.b32.xlu0 %v355, 124
      %v375 = vpop.permute.xlu0 %374
      %376 = vrot.lane.b32.xlu0 %v356, 124
      %v377 = vpop.permute.xlu0 %376
      %378 = vrot.lane.b32.xlu0 %v357, 124
      %v379 = vpop.permute.xlu0 %378
      %380 = vrot.lane.b32.xlu0 %v358, 124
      %v381 = vpop.permute.xlu0 %380
      %382 = vrot.lane.b32.xlu0 %v359, 124
      %v383 = vpop.permute.xlu0 %382
      %384 = vrot.lane.b32.xlu0 %v360, 124
      %v385 = vpop.permute.xlu0 %384
      %386 = vrot.lane.b32.xlu0 %v361, 124
      %v387 = vpop.permute.xlu0 %386
      %388 = vrot.lane.b32.xlu0 %v362, 124
      %v389 = vpop.permute.xlu0 %388
      %390 = vrot.lane.b32.xlu0 %v363, 124
      %v391 = vpop.permute.xlu0 %390
      %392 = vrot.lane.b32.xlu0 %v364, 124
      %v393 = vpop.permute.xlu0 %392
      %394 = vrot.lane.b32.xlu0 %v365, 124
      %v395 = vpop.permute.xlu0 %394
      %396 = vrot.lane.b32.xlu0 %v366, 124
      %v397 = vpop.permute.xlu0 %396
      %398 = vrot.lane.b32.xlu0 %v367, 124
      %v399 = vpop.permute.xlu0 %398
      %400 = vrot.lane.b32.xlu0 %v352, 4
      %v401 = vpop.permute.xlu0 %400
      %402 = vrot.lane.b32.xlu0 %v353, 4
      %v403 = vpop.permute.xlu0 %402
      %404 = vrot.lane.b32.xlu0 %v354, 4
      %v405 = vpop.permute.xlu0 %404
      %406 = vrot.lane.b32.xlu0 %v355, 4
      %v407 = vpop.permute.xlu0 %406
      %408 = vrot.lane.b32.xlu0 %v356, 4
      %v409 = vpop.permute.xlu0 %408
      %410 = vrot.lane.b32.xlu0 %v357, 4
      %v411 = vpop.permute.xlu0 %410
      %412 = vrot.lane.b32.xlu0 %v358, 4
      %v413 = vpop.permute.xlu0 %412
      %414 = vrot.lane.b32.xlu0 %v359, 4
      %v415 = vpop.permute.xlu0 %414
      %416 = vrot.lane.b32.xlu0 %v360, 4
      %v417 = vpop.permute.xlu0 %416
      %418 = vrot.lane.b32.xlu0 %v361, 4
      %v419 = vpop.permute.xlu0 %418
      %420 = vrot.lane.b32.xlu0 %v362, 4
      %v421 = vpop.permute.xlu0 %420
      %422 = vrot.lane.b32.xlu0 %v363, 4
      %v423 = vpop.permute.xlu0 %422
      %424 = vrot.lane.b32.xlu0 %v364, 4
      %v425 = vpop.permute.xlu0 %424
      %426 = vrot.lane.b32.xlu0 %v365, 4
      %v427 = vpop.permute.xlu0 %426
      %428 = vrot.lane.b32.xlu0 %v366, 4
      %v429 = vpop.permute.xlu0 %428
      %430 = vrot.lane.b32.xlu0 %v367, 4
      %v431 = vpop.permute.xlu0 %430
      %v432 = vand.u32 %v167, 4
      %vm433 = vcmp.eq.s32.totalorder %v432, 0
      %v434 = vsel %vm433, 1, 0
      %vm435 = vcmp.eq.s32.totalorder %v434, 1
      %v436 = vsel %vm435, %v369, %v401
      %v437 = vsel %vm435, %v371, %v403
      %v438 = vsel %vm435, %v373, %v405
      %v439 = vsel %vm435, %v375, %v407
      %v440 = vsel %vm435, %v377, %v409
      %v441 = vsel %vm435, %v379, %v411
      %v442 = vsel %vm435, %v381, %v413
      %v443 = vsel %vm435, %v383, %v415
      %v444 = vsel %vm435, %v385, %v417
      %v445 = vsel %vm435, %v387, %v419
      %v446 = vsel %vm435, %v389, %v421
      %v447 = vsel %vm435, %v391, %v423
      %v448 = vsel %vm435, %v393, %v425
      %v449 = vsel %vm435, %v395, %v427
      %v450 = vsel %vm435, %v397, %v429
      %v451 = vsel %vm435, %v399, %v431
      %v452 = vmax.f32 %v352, %v436
      %v453 = vmax.f32 %v353, %v437
      %v454 = vmax.f32 %v354, %v438
      %v455 = vmax.f32 %v355, %v439
      %v456 = vmax.f32 %v356, %v440
      %v457 = vmax.f32 %v357, %v441
      %v458 = vmax.f32 %v358, %v442
      %v459 = vmax.f32 %v359, %v443
      %v460 = vmax.f32 %v360, %v444
      %v461 = vmax.f32 %v361, %v445
      %v462 = vmax.f32 %v362, %v446
      %v463 = vmax.f32 %v363, %v447
      %v464 = vmax.f32 %v364, %v448
      %v465 = vmax.f32 %v365, %v449
      %v466 = vmax.f32 %v366, %v450
      %v467 = vmax.f32 %v367, %v451
      %468 = vrot.lane.b32.xlu0 %v452, 120
      %v469 = vpop.permute.xlu0 %468
      %470 = vrot.lane.b32.xlu0 %v453, 120
      %v471 = vpop.permute.xlu0 %470
      %472 = vrot.lane.b32.xlu0 %v454, 120
      %v473 = vpop.permute.xlu0 %472
      %474 = vrot.lane.b32.xlu0 %v455, 120
      %v475 = vpop.permute.xlu0 %474
      %476 = vrot.lane.b32.xlu0 %v456, 120
      %v477 = vpop.permute.xlu0 %476
      %478 = vrot.lane.b32.xlu0 %v457, 120
      %v479 = vpop.permute.xlu0 %478
      %480 = vrot.lane.b32.xlu0 %v458, 120
      %v481 = vpop.permute.xlu0 %480
      %482 = vrot.lane.b32.xlu0 %v459, 120
      %v483 = vpop.permute.xlu0 %482
      %484 = vrot.lane.b32.xlu0 %v460, 120
      %v485 = vpop.permute.xlu0 %484
      %486 = vrot.lane.b32.xlu0 %v461, 120
      %v487 = vpop.permute.xlu0 %486
      %488 = vrot.lane.b32.xlu0 %v462, 120
      %v489 = vpop.permute.xlu0 %488
      %490 = vrot.lane.b32.xlu0 %v463, 120
      %v491 = vpop.permute.xlu0 %490
      %492 = vrot.lane.b32.xlu0 %v464, 120
      %v493 = vpop.permute.xlu0 %492
      %494 = vrot.lane.b32.xlu0 %v465, 120
      %v495 = vpop.permute.xlu0 %494
      %496 = vrot.lane.b32.xlu0 %v466, 120
      %v497 = vpop.permute.xlu0 %496
      %498 = vrot.lane.b32.xlu0 %v467, 120
      %v499 = vpop.permute.xlu0 %498
      %500 = vrot.lane.b32.xlu0 %v452, 8
      %v501 = vpop.permute.xlu0 %500
      %502 = vrot.lane.b32.xlu0 %v453, 8
      %v503 = vpop.permute.xlu0 %502
      %504 = vrot.lane.b32.xlu0 %v454, 8
      %v505 = vpop.permute.xlu0 %504
      %506 = vrot.lane.b32.xlu0 %v455, 8
      %v507 = vpop.permute.xlu0 %506
      %508 = vrot.lane.b32.xlu0 %v456, 8
      %v509 = vpop.permute.xlu0 %508
      %510 = vrot.lane.b32.xlu0 %v457, 8
      %v511 = vpop.permute.xlu0 %510
      %512 = vrot.lane.b32.xlu0 %v458, 8
      %v513 = vpop.permute.xlu0 %512
      %514 = vrot.lane.b32.xlu0 %v459, 8
      %v515 = vpop.permute.xlu0 %514
      %516 = vrot.lane.b32.xlu0 %v460, 8
      %v517 = vpop.permute.xlu0 %516
      %518 = vrot.lane.b32.xlu0 %v461, 8
      %v519 = vpop.permute.xlu0 %518
      %520 = vrot.lane.b32.xlu0 %v462, 8
      %v521 = vpop.permute.xlu0 %520
      %522 = vrot.lane.b32.xlu0 %v463, 8
      %v523 = vpop.permute.xlu0 %522
      %524 = vrot.lane.b32.xlu0 %v464, 8
      %v525 = vpop.permute.xlu0 %524
      %526 = vrot.lane.b32.xlu0 %v465, 8
      %v527 = vpop.permute.xlu0 %526
      %528 = vrot.lane.b32.xlu0 %v466, 8
      %v529 = vpop.permute.xlu0 %528
      %530 = vrot.lane.b32.xlu0 %v467, 8
      %v531 = vpop.permute.xlu0 %530
      %v532 = vand.u32 %v167, 8
      %vm533 = vcmp.eq.s32.totalorder %v532, 0
      %v534 = vsel %vm533, 1, 0
      %vm535 = vcmp.eq.s32.totalorder %v534, 1
      %v536 = vsel %vm535, %v469, %v501
      %v537 = vsel %vm535, %v471, %v503
      %v538 = vsel %vm535, %v473, %v505
      %v539 = vsel %vm535, %v475, %v507
      %v540 = vsel %vm535, %v477, %v509
      %v541 = vsel %vm535, %v479, %v511
      %v542 = vsel %vm535, %v481, %v513
      %v543 = vsel %vm535, %v483, %v515
      %v544 = vsel %vm535, %v485, %v517
      %v545 = vsel %vm535, %v487, %v519
      %v546 = vsel %vm535, %v489, %v521
      %v547 = vsel %vm535, %v491, %v523
      %v548 = vsel %vm535, %v493, %v525
      %v549 = vsel %vm535, %v495, %v527
      %v550 = vsel %vm535, %v497, %v529
      %v551 = vsel %vm535, %v499, %v531
      %v552 = vmax.f32 %v452, %v536
      %v553 = vmax.f32 %v453, %v537
      %v554 = vmax.f32 %v454, %v538
      %v555 = vmax.f32 %v455, %v539
      %v556 = vmax.f32 %v456, %v540
      %v557 = vmax.f32 %v457, %v541
      %v558 = vmax.f32 %v458, %v542
      %v559 = vmax.f32 %v459, %v543
      %v560 = vmax.f32 %v460, %v544
      %v561 = vmax.f32 %v461, %v545
      %v562 = vmax.f32 %v462, %v546
      %v563 = vmax.f32 %v463, %v547
      %v564 = vmax.f32 %v464, %v548
      %v565 = vmax.f32 %v465, %v549
      %v566 = vmax.f32 %v466, %v550
      %v567 = vmax.f32 %v467, %v551
      %vm568 = vcmp.eq.f32.partialorder %v149, %v552
      %vm569 = vcmp.eq.f32.partialorder %v150, %v553
      %vm570 = vcmp.eq.f32.partialorder %v151, %v554
      %vm571 = vcmp.eq.f32.partialorder %v152, %v555
      %vm572 = vcmp.eq.f32.partialorder %v153, %v556
      %vm573 = vcmp.eq.f32.partialorder %v154, %v557
      %vm574 = vcmp.eq.f32.partialorder %v155, %v558
      %vm575 = vcmp.eq.f32.partialorder %v156, %v559
      %vm576 = vcmp.eq.f32.partialorder %v157, %v560
      %vm577 = vcmp.eq.f32.partialorder %v158, %v561
      %vm578 = vcmp.eq.f32.partialorder %v159, %v562
      %vm579 = vcmp.eq.f32.partialorder %v160, %v563
      %vm580 = vcmp.eq.f32.partialorder %v161, %v564
      %vm581 = vcmp.eq.f32.partialorder %v162, %v565
      %vm582 = vcmp.eq.f32.partialorder %v163, %v566
      %vm583 = vcmp.eq.f32.partialorder %v164, %v567
      %v584 = vsel %vm568, 1, 0
      %v585 = vsel %vm569, 1, 0
      %v586 = vsel %vm570, 1, 0
      %v587 = vsel %vm571, 1, 0
      %v588 = vsel %vm572, 1, 0
      %v589 = vsel %vm573, 1, 0
      %v590 = vsel %vm574, 1, 0
      %v591 = vsel %vm575, 1, 0
      %v592 = vsel %vm576, 1, 0
      %v593 = vsel %vm577, 1, 0
      %v594 = vsel %vm578, 1, 0
      %v595 = vsel %vm579, 1, 0
      %v596 = vsel %vm580, 1, 0
      %v597 = vsel %vm581, 1, 0
      %v598 = vsel %vm582, 1, 0
      %v599 = vsel %vm583, 1, 0
      %v600 = vcvt.s32.f32 %v584
      %v601 = vcvt.s32.f32 %v585
      %v602 = vcvt.s32.f32 %v586
      %v603 = vcvt.s32.f32 %v587
      %v604 = vcvt.s32.f32 %v588
      %v605 = vcvt.s32.f32 %v589
      %v606 = vcvt.s32.f32 %v590
      %v607 = vcvt.s32.f32 %v591
      %v608 = vcvt.s32.f32 %v592
      %v609 = vcvt.s32.f32 %v593
      %v610 = vcvt.s32.f32 %v594
      %v611 = vcvt.s32.f32 %v595
      %v612 = vcvt.s32.f32 %v596
      %v613 = vcvt.s32.f32 %v597
      %v614 = vcvt.s32.f32 %v598
      %v615 = vcvt.s32.f32 %v599
      %616 = vrot.lane.b32.xlu0 %v600, 1
      %v617 = vpop.permute.xlu0 %616
      %618 = vrot.lane.b32.xlu0 %v601, 1
      %v619 = vpop.permute.xlu0 %618
      %620 = vrot.lane.b32.xlu0 %v602, 1
      %v621 = vpop.permute.xlu0 %620
      %622 = vrot.lane.b32.xlu0 %v603, 1
      %v623 = vpop.permute.xlu0 %622
      %624 = vrot.lane.b32.xlu0 %v604, 1
      %v625 = vpop.permute.xlu0 %624
      %626 = vrot.lane.b32.xlu0 %v605, 1
      %v627 = vpop.permute.xlu0 %626
      %628 = vrot.lane.b32.xlu0 %v606, 1
      %v629 = vpop.permute.xlu0 %628
      %630 = vrot.lane.b32.xlu0 %v607, 1
      %v631 = vpop.permute.xlu0 %630
      %632 = vrot.lane.b32.xlu0 %v608, 1
      %v633 = vpop.permute.xlu0 %632
      %634 = vrot.lane.b32.xlu0 %v609, 1
      %v635 = vpop.permute.xlu0 %634
      %636 = vrot.lane.b32.xlu0 %v610, 1
      %v637 = vpop.permute.xlu0 %636
      %638 = vrot.lane.b32.xlu0 %v611, 1
      %v639 = vpop.permute.xlu0 %638
      %640 = vrot.lane.b32.xlu0 %v612, 1
      %v641 = vpop.permute.xlu0 %640
      %642 = vrot.lane.b32.xlu0 %v613, 1
      %v643 = vpop.permute.xlu0 %642
      %644 = vrot.lane.b32.xlu0 %v614, 1
      %v645 = vpop.permute.xlu0 %644
      %646 = vrot.lane.b32.xlu0 %v615, 1
      %v647 = vpop.permute.xlu0 %646
      %vm648 = vcmp.ge.s32.totalorder %v167, 1
      %v649 = vsel %vm648, 1, 0
      %vm650 = vcmp.eq.s32.totalorder %v649, 1
      %v651 = vsel %vm650, %v617, 0.0
      %v652 = vsel %vm650, %v619, 0.0
      %v653 = vsel %vm650, %v621, 0.0
      %v654 = vsel %vm650, %v623, 0.0
      %v655 = vsel %vm650, %v625, 0.0
      %v656 = vsel %vm650, %v627, 0.0
      %v657 = vsel %vm650, %v629, 0.0
      %v658 = vsel %vm650, %v631, 0.0
      %v659 = vsel %vm650, %v633, 0.0
      %v660 = vsel %vm650, %v635, 0.0
      %v661 = vsel %vm650, %v637, 0.0
      %v662 = vsel %vm650, %v639, 0.0
      %v663 = vsel %vm650, %v641, 0.0
      %v664 = vsel %vm650, %v643, 0.0
      %v665 = vsel %vm650, %v645, 0.0
      %v666 = vsel %vm650, %v647, 0.0
      %v667 = vadd.f32 %v600, %v651
      %v668 = vadd.f32 %v601, %v652
      %v669 = vadd.f32 %v602, %v653
      %v670 = vadd.f32 %v603, %v654
      %v671 = vadd.f32 %v604, %v655
      %v672 = vadd.f32 %v605, %v656
      %v673 = vadd.f32 %v606, %v657
      %v674 = vadd.f32 %v607, %v658
      %v675 = vadd.f32 %v608, %v659
      %v676 = vadd.f32 %v609, %v660
      %v677 = vadd.f32 %v610, %v661
      %v678 = vadd.f32 %v611, %v662
      %v679 = vadd.f32 %v612, %v663
      %v680 = vadd.f32 %v613, %v664
      %v681 = vadd.f32 %v614, %v665
      %v682 = vadd.f32 %v615, %v666
      %683 = vrot.lane.b32.xlu0 %v667, 2
      %v684 = vpop.permute.xlu0 %683
      %685 = vrot.lane.b32.xlu0 %v668, 2
      %v686 = vpop.permute.xlu0 %685
      %687 = vrot.lane.b32.xlu0 %v669, 2
      %v688 = vpop.permute.xlu0 %687
      %689 = vrot.lane.b32.xlu0 %v670, 2
      %v690 = vpop.permute.xlu0 %689
      %691 = vrot.lane.b32.xlu0 %v671, 2
      %v692 = vpop.permute.xlu0 %691
      %693 = vrot.lane.b32.xlu0 %v672, 2
      %v694 = vpop.permute.xlu0 %693
      %695 = vrot.lane.b32.xlu0 %v673, 2
      %v696 = vpop.permute.xlu0 %695
      %697 = vrot.lane.b32.xlu0 %v674, 2
      %v698 = vpop.permute.xlu0 %697
      %699 = vrot.lane.b32.xlu0 %v675, 2
      %v700 = vpop.permute.xlu0 %699
      %701 = vrot.lane.b32.xlu0 %v676, 2
      %v702 = vpop.permute.xlu0 %701
      %703 = vrot.lane.b32.xlu0 %v677, 2
      %v704 = vpop.permute.xlu0 %703
      %705 = vrot.lane.b32.xlu0 %v678, 2
      %v706 = vpop.permute.xlu0 %705
      %707 = vrot.lane.b32.xlu0 %v679, 2
      %v708 = vpop.permute.xlu0 %707
      %709 = vrot.lane.b32.xlu0 %v680, 2
      %v710 = vpop.permute.xlu0 %709
      %711 = vrot.lane.b32.xlu0 %v681, 2
      %v712 = vpop.permute.xlu0 %711
      %713 = vrot.lane.b32.xlu0 %v682, 2
      %v714 = vpop.permute.xlu0 %713
      %vm715 = vcmp.ge.s32.totalorder %v167, 2
      %v716 = vsel %vm715, 1, 0
      %vm717 = vcmp.eq.s32.totalorder %v716, 1
      %v718 = vsel %vm717, %v684, 0.0
      %v719 = vsel %vm717, %v686, 0.0
      %v720 = vsel %vm717, %v688, 0.0
      %v721 = vsel %vm717, %v690, 0.0
      %v722 = vsel %vm717, %v692, 0.0
      %v723 = vsel %vm717, %v694, 0.0
      %v724 = vsel %vm717, %v696, 0.0
      %v725 = vsel %vm717, %v698, 0.0
      %v726 = vsel %vm717, %v700, 0.0
      %v727 = vsel %vm717, %v702, 0.0
      %v728 = vsel %vm717, %v704, 0.0
      %v729 = vsel %vm717, %v706, 0.0
      %v730 = vsel %vm717, %v708, 0.0
      %v731 = vsel %vm717, %v710, 0.0
      %v732 = vsel %vm717, %v712, 0.0
      %v733 = vsel %vm717, %v714, 0.0
      %v734 = vadd.f32 %v667, %v718
      %v735 = vadd.f32 %v668, %v719
      %v736 = vadd.f32 %v669, %v720
      %v737 = vadd.f32 %v670, %v721
      %v738 = vadd.f32 %v671, %v722
      %v739 = vadd.f32 %v672, %v723
      %v740 = vadd.f32 %v673, %v724
      %v741 = vadd.f32 %v674, %v725
      %v742 = vadd.f32 %v675, %v726
      %v743 = vadd.f32 %v676, %v727
      %v744 = vadd.f32 %v677, %v728
      %v745 = vadd.f32 %v678, %v729
      %v746 = vadd.f32 %v679, %v730
      %v747 = vadd.f32 %v680, %v731
      %v748 = vadd.f32 %v681, %v732
      %v749 = vadd.f32 %v682, %v733
      %750 = vrot.lane.b32.xlu0 %v734, 4
      %v751 = vpop.permute.xlu0 %750
      %752 = vrot.lane.b32.xlu0 %v735, 4
      %v753 = vpop.permute.xlu0 %752
      %754 = vrot.lane.b32.xlu0 %v736, 4
      %v755 = vpop.permute.xlu0 %754
      %756 = vrot.lane.b32.xlu0 %v737, 4
      %v757 = vpop.permute.xlu0 %756
      %758 = vrot.lane.b32.xlu0 %v738, 4
      %v759 = vpop.permute.xlu0 %758
      %760 = vrot.lane.b32.xlu0 %v739, 4
      %v761 = vpop.permute.xlu0 %760
      %762 = vrot.lane.b32.xlu0 %v740, 4
      %v763 = vpop.permute.xlu0 %762
      %764 = vrot.lane.b32.xlu0 %v741, 4
      %v765 = vpop.permute.xlu0 %764
      %766 = vrot.lane.b32.xlu0 %v742, 4
      %v767 = vpop.permute.xlu0 %766
      %768 = vrot.lane.b32.xlu0 %v743, 4
      %v769 = vpop.permute.xlu0 %768
      %770 = vrot.lane.b32.xlu0 %v744, 4
      %v771 = vpop.permute.xlu0 %770
      %772 = vrot.lane.b32.xlu0 %v745, 4
      %v773 = vpop.permute.xlu0 %772
      %774 = vrot.lane.b32.xlu0 %v746, 4
      %v775 = vpop.permute.xlu0 %774
      %776 = vrot.lane.b32.xlu0 %v747, 4
      %v777 = vpop.permute.xlu0 %776
      %778 = vrot.lane.b32.xlu0 %v748, 4
      %v779 = vpop.permute.xlu0 %778
      %780 = vrot.lane.b32.xlu0 %v749, 4
      %v781 = vpop.permute.xlu0 %780
      %vm782 = vcmp.ge.s32.totalorder %v167, 4
      %v783 = vsel %vm782, 1, 0
      %vm784 = vcmp.eq.s32.totalorder %v783, 1
      %v785 = vsel %vm784, %v751, 0.0
      %v786 = vsel %vm784, %v753, 0.0
      %v787 = vsel %vm784, %v755, 0.0
      %v788 = vsel %vm784, %v757, 0.0
      %v789 = vsel %vm784, %v759, 0.0
      %v790 = vsel %vm784, %v761, 0.0
      %v791 = vsel %vm784, %v763, 0.0
      %v792 = vsel %vm784, %v765, 0.0
      %v793 = vsel %vm784, %v767, 0.0
      %v794 = vsel %vm784, %v769, 0.0
      %v795 = vsel %vm784, %v771, 0.0
      %v796 = vsel %vm784, %v773, 0.0
      %v797 = vsel %vm784, %v775, 0.0
      %v798 = vsel %vm784, %v777, 0.0
      %v799 = vsel %vm784, %v779, 0.0
      %v800 = vsel %vm784, %v781, 0.0
      %v801 = vadd.f32 %v734, %v785
      %v802 = vadd.f32 %v735, %v786
      %v803 = vadd.f32 %v736, %v787
      %v804 = vadd.f32 %v737, %v788
      %v805 = vadd.f32 %v738, %v789
      %v806 = vadd.f32 %v739, %v790
      %v807 = vadd.f32 %v740, %v791
      %v808 = vadd.f32 %v741, %v792
      %v809 = vadd.f32 %v742, %v793
      %v810 = vadd.f32 %v743, %v794
      %v811 = vadd.f32 %v744, %v795
      %v812 = vadd.f32 %v745, %v796
      %v813 = vadd.f32 %v746, %v797
      %v814 = vadd.f32 %v747, %v798
      %v815 = vadd.f32 %v748, %v799
      %v816 = vadd.f32 %v749, %v800
      %817 = vrot.lane.b32.xlu0 %v801, 8
      %v818 = vpop.permute.xlu0 %817
      %819 = vrot.lane.b32.xlu0 %v802, 8
      %v820 = vpop.permute.xlu0 %819
      %821 = vrot.lane.b32.xlu0 %v803, 8
      %v822 = vpop.permute.xlu0 %821
      %823 = vrot.lane.b32.xlu0 %v804, 8
      %v824 = vpop.permute.xlu0 %823
      %825 = vrot.lane.b32.xlu0 %v805, 8
      %v826 = vpop.permute.xlu0 %825
      %827 = vrot.lane.b32.xlu0 %v806, 8
      %v828 = vpop.permute.xlu0 %827
      %829 = vrot.lane.b32.xlu0 %v807, 8
      %v830 = vpop.permute.xlu0 %829
      %831 = vrot.lane.b32.xlu0 %v808, 8
      %v832 = vpop.permute.xlu0 %831
      %833 = vrot.lane.b32.xlu0 %v809, 8
      %v834 = vpop.permute.xlu0 %833
      %835 = vrot.lane.b32.xlu0 %v810, 8
      %v836 = vpop.permute.xlu0 %835
      %837 = vrot.lane.b32.xlu0 %v811, 8
      %v838 = vpop.permute.xlu0 %837
      %839 = vrot.lane.b32.xlu0 %v812, 8
      %v840 = vpop.permute.xlu0 %839
      %841 = vrot.lane.b32.xlu0 %v813, 8
      %v842 = vpop.permute.xlu0 %841
      %843 = vrot.lane.b32.xlu0 %v814, 8
      %v844 = vpop.permute.xlu0 %843
      %845 = vrot.lane.b32.xlu0 %v815, 8
      %v846 = vpop.permute.xlu0 %845
      %847 = vrot.lane.b32.xlu0 %v816, 8
      %v848 = vpop.permute.xlu0 %847
      %vm849 = vcmp.ge.s32.totalorder %v167, 8
      %v850 = vsel %vm849, 1, 0
      %vm851 = vcmp.eq.s32.totalorder %v850, 1
      %v852 = vsel %vm851, %v818, 0.0
      %v853 = vsel %vm851, %v820, 0.0
      %v854 = vsel %vm851, %v822, 0.0
      %v855 = vsel %vm851, %v824, 0.0
      %v856 = vsel %vm851, %v826, 0.0
      %v857 = vsel %vm851, %v828, 0.0
      %v858 = vsel %vm851, %v830, 0.0
      %v859 = vsel %vm851, %v832, 0.0
      %v860 = vsel %vm851, %v834, 0.0
      %v861 = vsel %vm851, %v836, 0.0
      %v862 = vsel %vm851, %v838, 0.0
      %v863 = vsel %vm851, %v840, 0.0
      %v864 = vsel %vm851, %v842, 0.0
      %v865 = vsel %vm851, %v844, 0.0
      %v866 = vsel %vm851, %v846, 0.0
      %v867 = vsel %vm851, %v848, 0.0
      %v868 = vadd.f32 %v801, %v852
      %v869 = vadd.f32 %v802, %v853
      %v870 = vadd.f32 %v803, %v854
      %v871 = vadd.f32 %v804, %v855
      %v872 = vadd.f32 %v805, %v856
      %v873 = vadd.f32 %v806, %v857
      %v874 = vadd.f32 %v807, %v858
      %v875 = vadd.f32 %v808, %v859
      %v876 = vadd.f32 %v809, %v860
      %v877 = vadd.f32 %v810, %v861
      %v878 = vadd.f32 %v811, %v862
      %v879 = vadd.f32 %v812, %v863
      %v880 = vadd.f32 %v813, %v864
      %v881 = vadd.f32 %v814, %v865
      %v882 = vadd.f32 %v815, %v866
      %v883 = vadd.f32 %v816, %v867
      %vm884 = vcmp.eq.f32.partialorder %v868, 1.0
      %vm885 = vcmp.eq.f32.partialorder %v869, 1.0
      %vm886 = vcmp.eq.f32.partialorder %v870, 1.0
      %vm887 = vcmp.eq.f32.partialorder %v871, 1.0
      %vm888 = vcmp.eq.f32.partialorder %v872, 1.0
      %vm889 = vcmp.eq.f32.partialorder %v873, 1.0
      %vm890 = vcmp.eq.f32.partialorder %v874, 1.0
      %vm891 = vcmp.eq.f32.partialorder %v875, 1.0
      %vm892 = vcmp.eq.f32.partialorder %v876, 1.0
      %vm893 = vcmp.eq.f32.partialorder %v877, 1.0
      %vm894 = vcmp.eq.f32.partialorder %v878, 1.0
      %vm895 = vcmp.eq.f32.partialorder %v879, 1.0
      %vm896 = vcmp.eq.f32.partialorder %v880, 1.0
      %vm897 = vcmp.eq.f32.partialorder %v881, 1.0
      %vm898 = vcmp.eq.f32.partialorder %v882, 1.0
      %vm899 = vcmp.eq.f32.partialorder %v883, 1.0
      %vm900 = vmand %vm568, %vm884
      %vm901 = vmand %vm569, %vm885
      %vm902 = vmand %vm570, %vm886
      %vm903 = vmand %vm571, %vm887
      %vm904 = vmand %vm572, %vm888
      %vm905 = vmand %vm573, %vm889
      %vm906 = vmand %vm574, %vm890
      %vm907 = vmand %vm575, %vm891
      %vm908 = vmand %vm576, %vm892
      %vm909 = vmand %vm577, %vm893
      %vm910 = vmand %vm578, %vm894
      %vm911 = vmand %vm579, %vm895
      %vm912 = vmand %vm580, %vm896
      %vm913 = vmand %vm581, %vm897
      %vm914 = vmand %vm582, %vm898
      %vm915 = vmand %vm583, %vm899
      %v916 = vsel %vm900, 1, 0
      %v917 = vsel %vm901, 1, 0
      %v918 = vsel %vm902, 1, 0
      %v919 = vsel %vm903, 1, 0
      %v920 = vsel %vm904, 1, 0
      %v921 = vsel %vm905, 1, 0
      %v922 = vsel %vm906, 1, 0
      %v923 = vsel %vm907, 1, 0
      %v924 = vsel %vm908, 1, 0
      %v925 = vsel %vm909, 1, 0
      %v926 = vsel %vm910, 1, 0
      %v927 = vsel %vm911, 1, 0
      %v928 = vsel %vm912, 1, 0
      %v929 = vsel %vm913, 1, 0
      %v930 = vsel %vm914, 1, 0
      %v931 = vsel %vm915, 1, 0
      %v932 = vcvt.s32.f32 %v916
      %v933 = vcvt.s32.f32 %v917
      %v934 = vcvt.s32.f32 %v918
      %v935 = vcvt.s32.f32 %v919
      %v936 = vcvt.s32.f32 %v920
      %v937 = vcvt.s32.f32 %v921
      %v938 = vcvt.s32.f32 %v922
      %v939 = vcvt.s32.f32 %v923
      %v940 = vcvt.s32.f32 %v924
      %v941 = vcvt.s32.f32 %v925
      %v942 = vcvt.s32.f32 %v926
      %v943 = vcvt.s32.f32 %v927
      %v944 = vcvt.s32.f32 %v928
      %v945 = vcvt.s32.f32 %v929
      %v946 = vcvt.s32.f32 %v930
      %v947 = vcvt.s32.f32 %v931
      %v948 = vld [vmem:[%s1] sm:$0xff]
      %v949 = vld [vmem:[%s1 + $0x8] sm:$0xff]
      %v950 = vld [vmem:[%s1 + $0x10] sm:$0xff]
      %v951 = vld [vmem:[%s1 + $0x18] sm:$0xff]
      %v952 = vld [vmem:[%s1 + $0x20] sm:$0xff]
      %v953 = vld [vmem:[%s1 + $0x28] sm:$0xff]
      %v954 = vld [vmem:[%s1 + $0x30] sm:$0xff]
      %v955 = vld [vmem:[%s1 + $0x38] sm:$0xff]
      %v956 = vld [vmem:[%s1 + $0x40] sm:$0xff]
      %v957 = vld [vmem:[%s1 + $0x48] sm:$0xff]
      %v958 = vld [vmem:[%s1 + $0x50] sm:$0xff]
      %v959 = vld [vmem:[%s1 + $0x58] sm:$0xff]
      %v960 = vld [vmem:[%s1 + $0x60] sm:$0xff]
      %v961 = vld [vmem:[%s1 + $0x68] sm:$0xff]
      %v962 = vld [vmem:[%s1 + $0x70] sm:$0xff]
      %v963 = vld [vmem:[%s1 + $0x78] sm:$0xff]
      %v964 = vld [vmem:[%s1 + $0x80] sm:$0xff]
      %v965 = vld [vmem:[%s1 + $0x88] sm:$0xff]
      %v966 = vld [vmem:[%s1 + $0x90] sm:$0xff]
      %v967 = vld [vmem:[%s1 + $0x98] sm:$0xff]
      %v968 = vld [vmem:[%s1 + $0xa0] sm:$0xff]
      %v969 = vld [vmem:[%s1 + $0xa8] sm:$0xff]
      %v970 = vld [vmem:[%s1 + $0xb0] sm:$0xff]
      %v971 = vld [vmem:[%s1 + $0xb8] sm:$0xff]
      %v972 = vld [vmem:[%s1 + $0xc0] sm:$0xff]
      %v973 = vld [vmem:[%s1 + $0xc8] sm:$0xff]
      %v974 = vld [vmem:[%s1 + $0xd0] sm:$0xff]
      %v975 = vld [vmem:[%s1 + $0xd8] sm:$0xff]
      %v976 = vld [vmem:[%s1 + $0xe0] sm:$0xff]
      %v977 = vld [vmem:[%s1 + $0xe8] sm:$0xff]
      %v978 = vld [vmem:[%s1 + $0xf0] sm:$0xff]
      %v979 = vld [vmem:[%s1 + $0xf8] sm:$0xff]
      %980 = vmatprep.subr.mxu0 %v949
      %981 = vmatpush1.msra.mxu0 %v948
      %982 = vmatprep.subr.mxu0 %v951
      %983 = vmatpush1.msra.mxu0 %v950
      %984 = vmatprep.subr.mxu0 %v953
      %985 = vmatpush1.msra.mxu0 %v952
      %986 = vmatprep.subr.mxu0 %v955
      %987 = vmatpush1.msra.mxu0 %v954
      %988 = vmatprep.subr.mxu0 %v957
      %989 = vmatpush1.msra.mxu0 %v956
      %990 = vmatprep.subr.mxu0 %v959
      %991 = vmatpush1.msra.mxu0 %v958
      %992 = vmatprep.subr.mxu0 %v961
      %993 = vmatpush1.msra.mxu0 %v960
      %994 = vmatprep.subr.mxu0 %v963
      %995 = vmatpush1.msra.mxu0 %v962
      %996 = vmatprep.subr.mxu0 %v965
      %997 = vmatpush1.msra.mxu0 %v964
      %998 = vmatprep.subr.mxu0 %v967
      %999 = vmatpush1.msra.mxu0 %v966
      %1000 = vmatprep.subr.mxu0 %v969
      %1001 = vmatpush1.msra.mxu0 %v968
      %1002 = vmatprep.subr.mxu0 %v971
      %1003 = vmatpush1.msra.mxu0 %v970
      %1004 = vmatprep.subr.mxu0 %v973
      %1005 = vmatpush1.msra.mxu0 %v972
      %1006 = vmatprep.subr.mxu0 %v975
      %1007 = vmatpush1.msra.mxu0 %v974
      %1008 = vmatprep.subr.mxu0 %v977
      %1009 = vmatpush1.msra.mxu0 %v976
      %1010 = vmatprep.subr.mxu0 %v979
      %1011 = vmatpush1.msra.mxu0 %v978
      %1012 = vmatprep.subr.mxu0 0.0
      %1013 = vmatpush1.msra.mxu0 0.0
      %1014 = vmatprep.subr.mxu0 0.0
      %1015 = vmatpush1.msra.mxu0 0.0
      %1016 = vmatprep.subr.mxu0 0.0
      %1017 = vmatpush1.msra.mxu0 0.0
      %1018 = vmatprep.subr.mxu0 0.0
      %1019 = vmatpush1.msra.mxu0 0.0
      %1020 = vmatprep.subr.mxu0 0.0
      %1021 = vmatpush1.msra.mxu0 0.0
      %1022 = vmatprep.subr.mxu0 0.0
      %1023 = vmatpush1.msra.mxu0 0.0
      %1024 = vmatprep.subr.mxu0 0.0
      %1025 = vmatpush1.msra.mxu0 0.0
      %1026 = vmatprep.subr.mxu0 0.0
      %1027 = vmatpush1.msra.mxu0 0.0
      %1028 = vmatprep.subr.mxu0 0.0
      %1029 = vmatpush1.msra.mxu0 0.0
      %1030 = vmatprep.subr.mxu0 0.0
      %1031 = vmatpush1.msra.mxu0 0.0
      %1032 = vmatprep.subr.mxu0 0.0
      %1033 = vmatpush1.msra.mxu0 0.0
      %1034 = vmatprep.subr.mxu0 0.0
      %1035 = vmatpush1.msra.mxu0 0.0
      %1036 = vmatprep.subr.mxu0 0.0
      %1037 = vmatpush1.msra.mxu0 0.0
      %1038 = vmatprep.subr.mxu0 0.0
      %1039 = vmatpush1.msra.mxu0 0.0
      %1040 = vmatprep.subr.mxu0 0.0
      %1041 = vmatpush1.msra.mxu0 0.0
      %1042 = vmatprep.subr.mxu0 0.0
      %1043 = vmatpush1.msra.mxu0 0.0
      %1044 = vmatprep.mubr.f32.mxu0 0.0
      %1045 = vmatmul.mubr.f32.gmra.mrb[0].mxu0 %v932
      %v1046 = vpop.f32.mrb[0].mxu0
      %v1047 = vadd.f32 0.0, %v1046
      %v1048 = vpop.f32.mrb[0].mxu0
      %v1049 = vadd.f32 0.0, %v1048
      %1050 = vmatprep.mubr.f32.mxu0 0.0
      %1051 = vmatmul.mubr.f32.gmra.mrb[0].mxu0 %v933
      %v1052 = vpop.f32.mrb[0].mxu0
      %v1053 = vadd.f32 0.0, %v1052
      %v1054 = vpop.f32.mrb[0].mxu0
      %v1055 = vadd.f32 0.0, %v1054
      %1056 = vmatprep.mubr.f32.mxu0 0.0
      %1057 = vmatmul.mubr.f32.gmra.mrb[0].mxu0 %v934
      %v1058 = vpop.f32.mrb[0].mxu0
      %v1059 = vadd.f32 0.0, %v1058
      %v1060 = vpop.f32.mrb[0].mxu0
      %v1061 = vadd.f32 0.0, %v1060
      %1062 = vmatprep.mubr.f32.mxu0 0.0
      %1063 = vmatmul.mubr.f32.gmra.mrb[0].mxu0 %v935
      %v1064 = vpop.f32.mrb[0].mxu0
      %v1065 = vadd.f32 0.0, %v1064
      %v1066 = vpop.f32.mrb[0].mxu0
      %v1067 = vadd.f32 0.0, %v1066
      %1068 = vmatprep.mubr.f32.mxu0 0.0
      %1069 = vmatmul.mubr.f32.gmra.mrb[0].mxu0 %v936
      %v1070 = vpop.f32.mrb[0].mxu0
      %v1071 = vadd.f32 0.0, %v1070
      %v1072 = vpop.f32.mrb[0].mxu0
      %v1073 = vadd.f32 0.0, %v1072
      %1074 = vmatprep.mubr.f32.mxu0 0.0
      %1075 = vmatmul.mubr.f32.gmra.mrb[0].mxu0 %v937
      %v1076 = vpop.f32.mrb[0].mxu0
      %v1077 = vadd.f32 0.0, %v1076
      %v1078 = vpop.f32.mrb[0].mxu0
      %v1079 = vadd.f32 0.0, %v1078
      %1080 = vmatprep.mubr.f32.mxu0 0.0
      %1081 = vmatmul.mubr.f32.gmra.mrb[0].mxu0 %v938
      %v1082 = vpop.f32.mrb[0].mxu0
      %v1083 = vadd.f32 0.0, %v1082
      %v1084 = vpop.f32.mrb[0].mxu0
      %v1085 = vadd.f32 0.0, %v1084
      %1086 = vmatprep.mubr.f32.mxu0 0.0
      %1087 = vmatmul.mubr.f32.gmra.mrb[0].mxu0 %v939
      %v1088 = vpop.f32.mrb[0].mxu0
      %v1089 = vadd.f32 0.0, %v1088
      %v1090 = vpop.f32.mrb[0].mxu0
      %v1091 = vadd.f32 0.0, %v1090
      %1092 = vmatprep.mubr.f32.mxu0 0.0
      %1093 = vmatmul.mubr.f32.gmra.mrb[0].mxu0 %v940
      %v1094 = vpop.f32.mrb[0].mxu0
      %v1095 = vadd.f32 0.0, %v1094
      %v1096 = vpop.f32.mrb[0].mxu0
      %v1097 = vadd.f32 0.0, %v1096
      %1098 = vmatprep.mubr.f32.mxu0 0.0
      %1099 = vmatmul.mubr.f32.gmra.mrb[0].mxu0 %v941
      %v1100 = vpop.f32.mrb[0].mxu0
      %v1101 = vadd.f32 0.0, %v1100
      %v1102 = vpop.f32.mrb[0].mxu0
      %v1103 = vadd.f32 0.0, %v1102
      %1104 = vmatprep.mubr.f32.mxu0 0.0
      %1105 = vmatmul.mubr.f32.gmra.mrb[0].mxu0 %v942
      %v1106 = vpop.f32.mrb[0].mxu0
      %v1107 = vadd.f32 0.0, %v1106
      %v1108 = vpop.f32.mrb[0].mxu0
      %v1109 = vadd.f32 0.0, %v1108
      %1110 = vmatprep.mubr.f32.mxu0 0.0
      %1111 = vmatmul.mubr.f32.gmra.mrb[0].mxu0 %v943
      %v1112 = vpop.f32.mrb[0].mxu0
      %v1113 = vadd.f32 0.0, %v1112
      %v1114 = vpop.f32.mrb[0].mxu0
      %v1115 = vadd.f32 0.0, %v1114
      %1116 = vmatprep.mubr.f32.mxu0 0.0
      %1117 = vmatmul.mubr.f32.gmra.mrb[0].mxu0 %v944
      %v1118 = vpop.f32.mrb[0].mxu0
      %v1119 = vadd.f32 0.0, %v1118
      %v1120 = vpop.f32.mrb[0].mxu0
      %v1121 = vadd.f32 0.0, %v1120
      %1122 = vmatprep.mubr.f32.mxu0 0.0
      %1123 = vmatmul.mubr.f32.gmra.mrb[0].mxu0 %v945
      %v1124 = vpop.f32.mrb[0].mxu0
      %v1125 = vadd.f32 0.0, %v1124
      %v1126 = vpop.f32.mrb[0].mxu0
      %v1127 = vadd.f32 0.0, %v1126
      %1128 = vmatprep.mubr.f32.mxu0 0.0
      %1129 = vmatmul.mubr.f32.gmra.mrb[0].mxu0 %v946
      %v1130 = vpop.f32.mrb[0].mxu0
      %v1131 = vadd.f32 0.0, %v1130
      %v1132 = vpop.f32.mrb[0].mxu0
      %v1133 = vadd.f32 0.0, %v1132
      %1134 = vmatprep.mubr.f32.mxu0 0.0
      %1135 = vmatmul.mubr.f32.gmra.mrb[0].mxu0 %v947
      %v1136 = vpop.f32.mrb[0].mxu0
      %v1137 = vadd.f32 0.0, %v1136
      %v1138 = vpop.f32.mrb[0].mxu0
      %v1139 = vadd.f32 0.0, %v1138
      %1140 = vdwg.mxu0
      %1141 = vst [vmem:[%s147] sm:$0xff] %v1047
      %1142 = vst [vmem:[%s147 + $0x8] sm:$0xff] %v1049
      %1143 = vst [vmem:[%s147 + $0x10] sm:$0xff] %v1053
      %1144 = vst [vmem:[%s147 + $0x18] sm:$0xff] %v1055
      %1145 = vst [vmem:[%s147 + $0x20] sm:$0xff] %v1059
      %1146 = vst [vmem:[%s147 + $0x28] sm:$0xff] %v1061
      %1147 = vst [vmem:[%s147 + $0x30] sm:$0xff] %v1065
      %1148 = vst [vmem:[%s147 + $0x38] sm:$0xff] %v1067
      %1149 = vst [vmem:[%s147 + $0x40] sm:$0xff] %v1071
      %1150 = vst [vmem:[%s147 + $0x48] sm:$0xff] %v1073
      %1151 = vst [vmem:[%s147 + $0x50] sm:$0xff] %v1077
      %1152 = vst [vmem:[%s147 + $0x58] sm:$0xff] %v1079
      %1153 = vst [vmem:[%s147 + $0x60] sm:$0xff] %v1083
      %1154 = vst [vmem:[%s147 + $0x68] sm:$0xff] %v1085
      %1155 = vst [vmem:[%s147 + $0x70] sm:$0xff] %v1089
      %1156 = vst [vmem:[%s147 + $0x78] sm:$0xff] %v1091
      %1157 = vst [vmem:[%s147 + $0x80] sm:$0xff] %v1095
      %1158 = vst [vmem:[%s147 + $0x88] sm:$0xff] %v1097
      %1159 = vst [vmem:[%s147 + $0x90] sm:$0xff] %v1101
      %1160 = vst [vmem:[%s147 + $0x98] sm:$0xff] %v1103
      %1161 = vst [vmem:[%s147 + $0xa0] sm:$0xff] %v1107
      %1162 = vst [vmem:[%s147 + $0xa8] sm:$0xff] %v1109
      %1163 = vst [vmem:[%s147 + $0xb0] sm:$0xff] %v1113
      %1164 = vst [vmem:[%s147 + $0xb8] sm:$0xff] %v1115
      %1165 = vst [vmem:[%s147 + $0xc0] sm:$0xff] %v1119
      %1166 = vst [vmem:[%s147 + $0xc8] sm:$0xff] %v1121
      %1167 = vst [vmem:[%s147 + $0xd0] sm:$0xff] %v1125
      %1168 = vst [vmem:[%s147 + $0xd8] sm:$0xff] %v1127
      %1169 = vst [vmem:[%s147 + $0xe0] sm:$0xff] %v1131
      %1170 = vst [vmem:[%s147 + $0xe8] sm:$0xff] %v1133
      %1171 = vst [vmem:[%s147 + $0xf0] sm:$0xff] %v1137
      %1172 = vst [vmem:[%s147 + $0xf8] sm:$0xff] %v1139
      %s1173 = smul.u32 16, %s13
      %p1174 = scmp.lt.s32.totalorder %s1173, 63
      %s1175 = scalar_select %p1174, %s1173, 63
      %s1176 = smul.addr %s1175, 2
      %s1177 = smul.addr %s1176, 8
      %s1178 = scalar_lea.vmem %s2, %s1177
      // Predicated region
      $region29: #{forward.1} parent=27 // pred_check
        %p1179 = pneg %p78
      $region30: #{forward.1} parent=27 // pred_check_branch
        %1181 = sbr.rel (%p1179) target = $region32
      $region31: #{forward.1} parent=27 // pred_region
        %s1182 = smul.u32 16, %s13
      $region32: #{forward.1} parent=27 // pred_fallthru
        _
    $region28: #{forward.1} parent=5 // pred_fallthru
      _
    %p1183 = scmp.le.s32.totalorder 2, %s8
    // Predicated region
    $region33: #{forward.1} parent=5 // pred_check
      %p1184 = pneg %p1183
    $region34: #{forward.1} parent=5 // pred_check_branch
      %1186 = sbr.rel (%p1184) target = $region36
    $region35: #{forward.1} parent=5 // pred_region
      %s1187 = ssub.s32 %s8, 2
      // Predicated region
      $region37: #{forward.1} parent=35 // pred_check
        %p1188 = pneg %p84
      $region38: #{forward.1} parent=35 // pred_check_branch
        %1190 = sbr.rel (%p1188) target = $region40
      $region39: #{forward.1} parent=35 // pred_region
        %s1191 = smul.u32 16, %s14
        %p1192 = scmp.lt.s32.totalorder %s1191, 63
        %s1193 = scalar_select %p1192, %s1191, 63
        %s1194 = smul.addr %s1193, 2
        %s1195 = smul.addr %s1194, 8
        %s1196 = scalar_lea.vmem %s2, %s1195
      $region40: #{forward.1} parent=35 // pred_fallthru
        _
    $region36: #{forward.1} parent=5 // pred_fallthru
      _
  $region6: #{forward.1} parent=0 // loop_footer
    %s12 = sadd.s32 1, %s8
  $region7: #{forward.1} parent=0 // loop_footer_branch
    %7 = sbr.rel target = $region3
  $region8: #{forward.1} parent=0 // loop_exit
    _

</llo_original>
